<compile_context>
chip_gen: v7x
topology: tpu7x:2x2x1
jax: 0.10.0
libtpu: 0.0.40
codegen_flags: <defaults>
</compile_context>

<pallas_src>
import functools

import jax
import jax.numpy as jnp
from jax import lax
from jax.experimental import pallas as pl
from jax.experimental.pallas import tpu as pltpu

KH = KW = 3  # 3x3 conv, "same" padding


def _head_layers_kernel(x_head_ref, sum_other_ref, wband_ref, b_ref, o_ref,
                        head_sc, *, H, W, C, Cout):
    """Fused NAS-FPN head: all layers for one batch element.

    Grid = (batch, layer); layer is the inner, sequential ("arbitrary") axis.

    x_head_ref    : (1, H+2, (W+2)*C)        original head level, zero halo, flat lanes
    sum_other_ref : (1, H+2, (W+2)*C)        sum of non-head levels, zero halo, flat lanes
    wband_ref     : (1, KH, (W+2)*C, W*Cout) banded im2col conv weights for this layer (bf16)
    b_ref         : (1, 1, W*Cout)           bias pre-tiled across W (f32)
    o_ref         : (1, H, W*Cout)           lane-dense output (written at the last layer)
    head_sc       : VMEM (H+2, (W+2)*C) f32  evolving x[head_id]; persists across layers
    """
    l = pl.program_id(1)
    n_layers = pl.num_programs(1)

    # Layer 0 of each batch element: load the original head level into the scratch.
    @pl.when(l == 0)
    def _():
        head_sc[...] = x_head_ref[0]

    # layer 0 consumes x[head_id] alone; later layers consume sum(all levels)
    # = sum_other (constant across layers) + current head state.
    not_first = (l > 0).astype(jnp.float32)
    merged = head_sc[...] + not_first * sum_other_ref[0]       # (H+2, (W+2)*C) f32

    # 3x3 conv as three lane-dense MXU matmuls (one per kernel row) against banded
    # im2col weights: out[y, x*Cout+co] = sum_ky merged[y+ky, :] @ band[ky].
    # bf16 operands, f32 accumulation (single-pass MXU).
    acc = jnp.zeros((H, W * Cout), jnp.float32)
    for ky in range(KH):                                       # static unroll (3 taps)
        a = merged[ky:ky + H, :].astype(jnp.bfloat16)          # (H, (W+2)*C)
        acc = acc + jnp.dot(a, wband_ref[0, ky],
                            preferred_element_type=jnp.float32)
    acc = jnp.maximum(acc + b_ref[0], 0.0)                     # bias + ReLU in f32

    # Write the updated head state into the padded scratch interior (halo stays zero)
    # so the next layer's merge sees the new x[head_id].  Requires Cout == C.
    @pl.when(l < n_layers - 1)
    def _():
        head_sc[1:H + 1, C:(W + 1) * C] = acc

    @pl.when(l == n_layers - 1)
    def _():
        o_ref[0] = acc.astype(o_ref.dtype)                     # lane-dense (H, W*Cout) store


def _banded_conv_weights(w_hwio, W):
    """(KH, KW, C, Cout) -> (KH, (W+2)*C, W*Cout) banded im2col weight matrix.

    band[ky, (x+kx)*C + c, x*Cout + co] = w[ky, kx, c, co]; zero elsewhere.
    """
    KH_, KW_, C, Cout = w_hwio.shape
    rows = []
    for ky in range(KH_):
        band = jnp.zeros(((W + 2) * C, W * Cout), w_hwio.dtype)
        for kx in range(KW_):
            # shift[x+kx, x] = 1  ->  kron places the (C, Cout) tap block on that band.
            shift = jnp.eye(W + 2, W, k=-kx, dtype=w_hwio.dtype)
            band = band + jnp.kron(shift, w_hwio[ky, kx])
        rows.append(band)
    return jnp.stack(rows, axis=0)


def head_creator_forward(x_list_nchw, params, head_id):
    """Mirrors HeadCreator.forward for the synthetic conv/merge head.

    x_list_nchw : list of (B, C, H, W) pyramid levels (same shape on every level)
    params      : list of (w_hwio (3,3,C,C), b (C,)) per layer module
    returns     : x[head_id] after the last layer, NCHW
    """
    x = [jnp.transpose(t, (0, 2, 3, 1)) for t in x_list_nchw]   # NCHW -> NHWC
    B, H, W, C = x[head_id].shape
    L = len(params)
    Cout = params[0][0].shape[-1]
    assert Cout == C, "head keeps the channel count (required by the merge-sum)"

    def pad_flat(t):                 # (B,H,W,C) -> (B, H+2, (W+2)*C) with zero halo
        tp = jnp.pad(t, ((0, 0), (1, 1), (1, 1), (0, 0)))
        return tp.reshape(B, H + 2, (W + 2) * C)

    x_head_flat = pad_flat(x[head_id])
    others = [x[i] for i in range(len(x)) if i != head_id]
    sum_other = others[0] if others else jnp.zeros_like(x[head_id])
    for t in others[1:]:
        sum_other = sum_other + t
    sum_other_flat = pad_flat(sum_other)

    # Per-layer banded im2col weights (bf16, single-pass MXU) and lane-dense biases.
    wband = jnp.stack([_banded_conv_weights(w, W) for (w, _) in params], axis=0)
    wband = wband.astype(jnp.bfloat16)                          # (L, KH, (W+2)*C, W*Cout)
    btile = jnp.stack([jnp.tile(b, W)[None, :] for (_, b) in params], axis=0)  # (L,1,W*Cout)

    kernel = functools.partial(_head_layers_kernel, H=H, W=W, C=C, Cout=Cout)
    out_flat = pl.pallas_call(
        kernel,
        out_shape=jax.ShapeDtypeStruct((B, H, W * Cout), jnp.float32),
        grid=(B, L),
        in_specs=[
            pl.BlockSpec((1, H + 2, (W + 2) * C), lambda b, l: (b, 0, 0)),
            pl.BlockSpec((1, H + 2, (W + 2) * C), lambda b, l: (b, 0, 0)),
            pl.BlockSpec((1, KH, (W + 2) * C, W * Cout), lambda b, l: (l, 0, 0, 0)),
            pl.BlockSpec((1, 1, W * Cout), lambda b, l: (l, 0, 0)),
        ],
        out_specs=pl.BlockSpec((1, H, W * Cout), lambda b, l: (b, 0, 0)),
        scratch_shapes=[pltpu.VMEM((H + 2, (W + 2) * C), jnp.float32)],
        compiler_params=pltpu.CompilerParams(
            dimension_semantics=("parallel", "arbitrary")),
    )(x_head_flat, sum_other_flat, wband, btile)

    out = out_flat.reshape(B, H, W, Cout)      # same row-major bytes, free
    return jnp.transpose(out, (0, 3, 1, 2))    # back to NCHW like the PyTorch module


# ---------------- pure-JAX f32 reference (ground truth) ----------------
def _conv_ref(x_nhwc, w, b):
    y = lax.conv_general_dilated(
        x_nhwc, w, window_strides=(1, 1), padding="SAME",
        dimension_numbers=("NHWC", "HWIO", "NHWC"),
        precision=lax.Precision.HIGHEST)
    return jnp.maximum(y + b[None, None, None, :], 0.0)


def _forward_ref(x_list_nchw, params, head_id):
    x = [jnp.transpose(t, (0, 2, 3, 1)) for t in x_list_nchw]
    w0, b0 = params[0]
    x[head_id] = _conv_ref(x[head_id], w0, b0)
    for (w, b) in params[1:]:
        merged = x[0]
        for t in x[1:]:
            merged = merged + t
        x[head_id] = _conv_ref(merged, w, b)
    return jnp.transpose(x[head_id], (0, 3, 1, 2))


if __name__ == "__main__":
    B, C, H, W = 2, 8, 16, 16     # small NCHW feature maps
    N_LEVELS = 3                  # pyramid levels in the list x
    N_LAYERS = 3                  # layer_0 + two merge modules
    HEAD_ID = 1

    key = jax.random.PRNGKey(0)
    keys = jax.random.split(key, N_LEVELS + 2 * N_LAYERS)

    # pyramid inputs (NCHW, like PyTorch)
    x_list = [jax.random.normal(keys[i], (B, C, H, W), dtype=jnp.float32)
              for i in range(N_LEVELS)]

    # deterministic per-layer conv params, HWIO weights
    scale = 1.0 / jnp.sqrt(jnp.float32(KH * KW * C))
    params = []
    for l in range(N_LAYERS):
        wk = jax.random.normal(keys[N_LEVELS + 2 * l],
                               (KH, KW, C, C), dtype=jnp.float32) * scale
        bk = jax.random.normal(keys[N_LEVELS + 2 * l + 1],
                               (C,), dtype=jnp.float32) * 0.01
        params.append((wk, bk))

    out = jax.block_until_ready(head_creator_forward(x_list, params, HEAD_ID))
    ref = jax.block_until_ready(_forward_ref(x_list, params, HEAD_ID))

    assert out.shape == (B, C, H, W)
    # The kernel uses single-pass bf16 MXU operands with f32 accumulation (per the perf
    # review); tolerance vs. the f32/HIGHEST reference is set accordingly.
    assert jnp.allclose(out, ref, rtol=2e-2, atol=3e-2), "mismatch vs reference"

    print("KERNEL_OK")
</pallas_src>

<mosaic_0001>
module attributes {stable_mosaic.version = 11 : i64} {
  func.func @_head_layers_kernel(%arg0: i32, %arg1: i32, %arg2: memref<1x18x144xf32, #tpu.memory_space<vmem>>, %arg3: memref<1x18x144xf32, #tpu.memory_space<vmem>>, %arg4: memref<1x3x144x128xbf16, #tpu.memory_space<vmem>>, %arg5: memref<1x1x128xf32, #tpu.memory_space<vmem>>, %arg6: memref<1x16x128xf32, #tpu.memory_space<vmem>>, %arg7: memref<18x144xf32, #tpu.memory_space<vmem>>) attributes {dimension_semantics = [#tpu.dimension_semantics<parallel>, #tpu.dimension_semantics<arbitrary>], iteration_bounds = array<i64: 2, 3>, scalar_prefetch = 0 : i64, scratch_operands = 1 : i64, tpu.core_type = #tpu.core_type<tc>, window_params = [{transform_indices = @transform_0, window_bounds = array<i64: 1, 18, 144>}, {transform_indices = @transform_1, window_bounds = array<i64: 1, 18, 144>}, {transform_indices = @transform_2, window_bounds = array<i64: 1, 3, 144, 128>}, {transform_indices = @transform_3, window_bounds = array<i64: 1, 1, 128>}, {transform_indices = @transform_4, window_bounds = array<i64: 1, 16, 128>}]} {
    %c0_i32 = arith.constant 0 : i32
    %0 = arith.cmpi eq, %arg1, %c0_i32 : i32
    %1 = arith.extui %0 : i1 to i32
    %c0_i32_0 = arith.constant 0 : i32
    %2 = arith.cmpi ne, %1, %c0_i32_0 : i32
    scf.if %2 {
      %c0_26 = arith.constant 0 : index
      %c0_27 = arith.constant 0 : index
      %c0_28 = arith.constant 0 : index
      %43 = vector.load %arg2[%c0_26, %c0_27, %c0_28] : memref<1x18x144xf32, #tpu.memory_space<vmem>>, vector<1x18x144xf32>
      %44 = vector.shape_cast %43 : vector<1x18x144xf32> to vector<18x144xf32>
      %c0_29 = arith.constant 0 : index
      %c0_30 = arith.constant 0 : index
      %45 = vector.load %arg7[%c0_29, %c0_30] : memref<18x144xf32, #tpu.memory_space<vmem>>, vector<18x144xf32>
      tpu.vector_store %arg7[%c0_29, %c0_30], %44 {strides = array<i32>} : memref<18x144xf32, #tpu.memory_space<vmem>>, vector<18x144xf32>,
    } else {
    }
    %c0_i32_1 = arith.constant 0 : i32
    %3 = arith.cmpi sgt, %arg1, %c0_i32_1 : i32
    %4 = arith.extui %3 : i1 to i32
    %5 = arith.sitofp %4 : i32 to f32
    %c0 = arith.constant 0 : index
    %c0_2 = arith.constant 0 : index
    %6 = vector.load %arg7[%c0, %c0_2] : memref<18x144xf32, #tpu.memory_space<vmem>>, vector<18x144xf32>
    %c0_3 = arith.constant 0 : index
    %c0_4 = arith.constant 0 : index
    %c0_5 = arith.constant 0 : index
    %7 = vector.load %arg3[%c0_3, %c0_4, %c0_5] : memref<1x18x144xf32, #tpu.memory_space<vmem>>, vector<1x18x144xf32>
    %8 = vector.shape_cast %7 : vector<1x18x144xf32> to vector<18x144xf32>
    %9 = vector.broadcast %5 : f32 to vector<18x144xf32>
    %10 = arith.mulf %9, %8 : vector<18x144xf32>
    %11 = arith.addf %6, %10 : vector<18x144xf32>
    %cst = arith.constant 0.000000e+00 : f32
    %12 = vector.broadcast %cst : f32 to vector<16x128xf32>
    %13 = vector.extract_strided_slice %11 {offsets = [0, 0], sizes = [16, 144], strides = [1, 1]} : vector<18x144xf32> to vector<16x144xf32>
    %14 = arith.truncf %13 : vector<16x144xf32> to vector<16x144xbf16>
    %c0_6 = arith.constant 0 : index
    %c0_7 = arith.constant 0 : index
    %c0_8 = arith.constant 0 : index
    %c0_9 = arith.constant 0 : index
    %15 = vector.load %arg4[%c0_6, %c0_7, %c0_8, %c0_9] : memref<1x3x144x128xbf16, #tpu.memory_space<vmem>>, vector<1x1x144x128xbf16>
    %16 = vector.shape_cast %15 : vector<1x1x144x128xbf16> to vector<144x128xbf16>
    %cst_10 = arith.constant dense<0.000000e+00> : vector<16x128xf32>
    %17 = tpu.matmul %14, %16, %cst_10 {dimension_numbers = #tpu.dot_dimension_numbers<[1], [0], [0], [1], [0, 0, 1, 1], [], []>} : vector<16x144xbf16>, vector<144x128xbf16>, vector<16x128xf32> -> vector<16x128xf32>
    %18 = arith.addf %12, %17 : vector<16x128xf32>
    %19 = vector.extract_strided_slice %11 {offsets = [1, 0], sizes = [16, 144], strides = [1, 1]} : vector<18x144xf32> to vector<16x144xf32>
    %20 = arith.truncf %19 : vector<16x144xf32> to vector<16x144xbf16>
    %c0_11 = arith.constant 0 : index
    %c1 = arith.constant 1 : index
    %c0_12 = arith.constant 0 : index
    %c0_13 = arith.constant 0 : index
    %21 = vector.load %arg4[%c0_11, %c1, %c0_12, %c0_13] : memref<1x3x144x128xbf16, #tpu.memory_space<vmem>>, vector<1x1x144x128xbf16>
    %22 = vector.shape_cast %21 : vector<1x1x144x128xbf16> to vector<144x128xbf16>
    %cst_14 = arith.constant dense<0.000000e+00> : vector<16x128xf32>
    %23 = tpu.matmul %20, %22, %cst_14 {dimension_numbers = #tpu.dot_dimension_numbers<[1], [0], [0], [1], [0, 0, 1, 1], [], []>} : vector<16x144xbf16>, vector<144x128xbf16>, vector<16x128xf32> -> vector<16x128xf32>
    %24 = arith.addf %18, %23 : vector<16x128xf32>
    %25 = vector.extract_strided_slice %11 {offsets = [2, 0], sizes = [16, 144], strides = [1, 1]} : vector<18x144xf32> to vector<16x144xf32>
    %26 = arith.truncf %25 : vector<16x144xf32> to vector<16x144xbf16>
    %c0_15 = arith.constant 0 : index
    %c2 = arith.constant 2 : index
    %c0_16 = arith.constant 0 : index
    %c0_17 = arith.constant 0 : index
    %27 = vector.load %arg4[%c0_15, %c2, %c0_16, %c0_17] : memref<1x3x144x128xbf16, #tpu.memory_space<vmem>>, vector<1x1x144x128xbf16>
    %28 = vector.shape_cast %27 : vector<1x1x144x128xbf16> to vector<144x128xbf16>
    %cst_18 = arith.constant dense<0.000000e+00> : vector<16x128xf32>
    %29 = tpu.matmul %26, %28, %cst_18 {dimension_numbers = #tpu.dot_dimension_numbers<[1], [0], [0], [1], [0, 0, 1, 1], [], []>} : vector<16x144xbf16>, vector<144x128xbf16>, vector<16x128xf32> -> vector<16x128xf32>
    %30 = arith.addf %24, %29 : vector<16x128xf32>
    %c0_19 = arith.constant 0 : index
    %c0_20 = arith.constant 0 : index
    %c0_21 = arith.constant 0 : index
    %31 = vector.load %arg5[%c0_19, %c0_20, %c0_21] : memref<1x1x128xf32, #tpu.memory_space<vmem>>, vector<1x1x128xf32>
    %32 = vector.shape_cast %31 : vector<1x1x128xf32> to vector<1x128xf32>
    %33 = vector.broadcast %32 : vector<1x128xf32> to vector<16x128xf32>
    %34 = arith.addf %30, %33 : vector<16x128xf32>
    %cst_22 = arith.constant 0.000000e+00 : f32
    %35 = vector.broadcast %cst_22 : f32 to vector<16x128xf32>
    %36 = arith.maximumf %34, %35 : vector<16x128xf32>
    %c2_i32 = arith.constant 2 : i32
    %37 = arith.cmpi slt, %arg1, %c2_i32 : i32
    %38 = arith.extui %37 : i1 to i32
    %c0_i32_23 = arith.constant 0 : i32
    %39 = arith.cmpi ne, %38, %c0_i32_23 : i32
    scf.if %39 {
      %c1_26 = arith.constant 1 : index
      %c8 = arith.constant 8 : index
      %43 = vector.load %arg7[%c1_26, %c8] : memref<18x144xf32, #tpu.memory_space<vmem>>, vector<16x128xf32>
      tpu.vector_store %arg7[%c1_26, %c8], %36 {strides = array<i32>} : memref<18x144xf32, #tpu.memory_space<vmem>>, vector<16x128xf32>,
    } else {
    }
    %c2_i32_24 = arith.constant 2 : i32
    %40 = arith.cmpi eq, %arg1, %c2_i32_24 : i32
    %41 = arith.extui %40 : i1 to i32
    %c0_i32_25 = arith.constant 0 : i32
    %42 = arith.cmpi ne, %41, %c0_i32_25 : i32
    scf.if %42 {
      %c0_26 = arith.constant 0 : index
      %c0_27 = arith.constant 0 : index
      %c0_28 = arith.constant 0 : index
      %43 = vector.load %arg6[%c0_26, %c0_27, %c0_28] : memref<1x16x128xf32, #tpu.memory_space<vmem>>, vector<1x16x128xf32>
      %44 = vector.shape_cast %43 : vector<1x16x128xf32> to vector<16x128xf32>
      %45 = vector.shape_cast %36 : vector<16x128xf32> to vector<1x16x128xf32>
      tpu.vector_store %arg6[%c0_26, %c0_27, %c0_28], %45 {strides = array<i32>} : memref<1x16x128xf32, #tpu.memory_space<vmem>>, vector<1x16x128xf32>,
    } else {
    }
    return
  }
  func.func @transform_0(%arg0: i32, %arg1: i32) -> (i32, i32, i32) {
    %c0_i32 = arith.constant 0 : i32
    %c0_i32_0 = arith.constant 0 : i32
    %c0_i32_1 = arith.constant 0 : i32
    return %arg0, %c0_i32, %c0_i32_0 : i32, i32, i32
  }
  func.func @transform_1(%arg0: i32, %arg1: i32) -> (i32, i32, i32) {
    %c0_i32 = arith.constant 0 : i32
    %c0_i32_0 = arith.constant 0 : i32
    %c0_i32_1 = arith.constant 0 : i32
    return %arg0, %c0_i32, %c0_i32_0 : i32, i32, i32
  }
  func.func @transform_2(%arg0: i32, %arg1: i32) -> (i32, i32, i32, i32) {
    %c0_i32 = arith.constant 0 : i32
    %c0_i32_0 = arith.constant 0 : i32
    %c0_i32_1 = arith.constant 0 : i32
    %c0_i32_2 = arith.constant 0 : i32
    return %arg1, %c0_i32, %c0_i32_0, %c0_i32_1 : i32, i32, i32, i32
  }
  func.func @transform_3(%arg0: i32, %arg1: i32) -> (i32, i32, i32) {
    %c0_i32 = arith.constant 0 : i32
    %c0_i32_0 = arith.constant 0 : i32
    %c0_i32_1 = arith.constant 0 : i32
    return %arg1, %c0_i32, %c0_i32_0 : i32, i32, i32
  }
  func.func @transform_4(%arg0: i32, %arg1: i32) -> (i32, i32, i32) {
    %c0_i32 = arith.constant 0 : i32
    %c0_i32_0 = arith.constant 0 : i32
    %c0_i32_1 = arith.constant 0 : i32
    return %arg0, %c0_i32, %c0_i32_0 : i32, i32, i32
  }
}

</mosaic_0001>

<llo_original>
// kernel: tpu_custom_call.1
$region0: #{tpu_custom_call.1}
  #allocation0 [shape = 'u32[]', space=smem, size = 0x4, offset = 0x4, fixed_abs, tag = 'smem constant byte address 0x4 - core index']
  #allocation1 [shape = 'u32[144,128]{1,0:T(1,128)}', space=vmem, size = 0x12000, scoped, tag = 'internal scratch']
  #allocation2 [shape = 'f32[18,144]{1,0:T(8,128)}', space=vmem, size = 0x6000, scoped, tag = 'scratch operand']
  %s0 = inlined_call_operand.vmem [shape: f32[2,18,144], index: 0, kind: input, shape index: {}]
  %s1 = inlined_call_operand.vmem [shape: f32[2,18,144], index: 1, kind: input, shape index: {}]
  %s2 = inlined_call_operand.hbm [shape: bf16[3,3,144,128], index: 2, kind: input, shape index: {}]
  %s3 = inlined_call_operand.vmem [shape: f32[3,1,128], index: 3, kind: input, shape index: {}]
  %s4 = inlined_call_operand.hbm [shape: f32[2,16,128], index: 4, kind: output, shape index: {}]
  %s5 = sld [smem:[#allocation0]]
  $region65: #{tpu_custom_call.1} parent=0
    _
  %s7 = ssub.s32 1, %s5
  %s8 = scalar_select 0, %s7, %s5
  $region1: #{tpu_custom_call.1} parent=0
    #allocation3 [shape = 'u8[221184]{0}', space=vmem, size = 0x36000, scoped, tag = 'input window, operand 2']
    #allocation4 [shape = 's32[2]{0}', space=sflag, size = 0x8, scoped, tag = 'scoped memory for tpu_custom_call.1']
    #allocation5 [shape = 's32[2]{0}', space=sflag, size = 0x8, scoped, tag = 'scoped memory for tpu_custom_call.1']
    #allocation6 [shape = 'u8[16384]{0}', space=vmem, size = 0x4000, scoped, tag = 'output window, operand 0']
    %9 = vsyncpa [#allocation4], 0
    %s10 = scalar_lea.sflag [#allocation4], 1
    %11 = vsyncpa %s10, 0
    %12 = vsyncpa [#allocation5], 0
    %s13 = scalar_lea.sflag [#allocation5], 1
    %14 = vsyncpa %s13, 0
    loop: start=0, step=1, limit=8
    $region2: #{tpu_custom_call.1} parent=1 // loop_pre_header
      _
    $region3: #{tpu_custom_call.1} parent=1 // loop_header
      %s16 = sphi 0, %s20
      %p17 = scmp.ge.s32.totalorder %s16, 8
      %s23 = sphi 0, %s35
      %s24 = sphi 0, %s31
      %s25 = sphi 0, %s23
      %s26 = sphi 0, %s24
      %s27 = sphi 0, %s25
      %s28 = sphi 0, %s26
      %s38 = sphi 0, %s40
      %s41 = sphi 0, %s38
      %s42 = sphi 0, %s41
      %s58 = sphi 0, %s42
      %s64 = sphi 0, %s66
      %s67 = sphi 0, %s64
      %s68 = sphi 0, %s67
      %s84 = sphi 0, %s68
      %s90 = sphi 0, %s92
      %s93 = sphi 0, %s90
      %s94 = sphi 0, %s93
      %s110 = sphi 0, %s94
      %s116 = sphi 0, %s118
      %s119 = sphi 0, %s116
      %s120 = sphi 0, %s119
      %s136 = sphi 0, %s120
      %s142 = sphi 0, %s144
      %s145 = sphi 0, %s142
      %s146 = sphi 0, %s145
      %s162 = sphi 0, %s146
    $region4: #{tpu_custom_call.1} parent=1 // loop_header_branch
      %19 = sbr.rel (%p17) target = $region8
    $region5: #{tpu_custom_call.1} parent=1 // loop_body
      %s21 = ssub.s32 %s16, 1
      %s22 = ssub.s32 %s16, 2
      %s29 = sadd.s32 1, %s24
      %p30 = scmp.ge.s32.totalorder %s29, 3
      %s31 = scalar_select %p30, 0, %s29
      %s32 = sadd.s32 1, %s23
      %s33 = scalar_select %p30, %s32, %s23
      %p34 = scmp.ge.s32.totalorder %s33, 2
      %s35 = scalar_select %p34, 0, %s33
      %s36 = ssub.s32 %s23, %s35
      %p37 = scmp.eq.s32.totalorder %s36, 0
      %s39 = sadd.s32 %s38, 1
      %s40 = scalar_select %p37, %s38, %s39
      %p43 = pneg %p37
      %p44 = scmp.eq.s32.totalorder %s16, 5
      %p45 = por %p43, %p44
      %p46 = scmp.ne.s32.totalorder %s38, %s41
      %p47 = scmp.eq.s32.totalorder %s16, 0
      %p48 = por %p46, %p47
      %p49 = scmp.ne.s32.totalorder %s38, %s41
      %p50 = scmp.eq.s32.totalorder %s21, 5
      %p51 = por %p49, %p50
      %p52 = scmp.ne.s32.totalorder %s41, %s42
      %p53 = scmp.eq.s32.totalorder %s21, 0
      %p54 = por %p52, %p53
      %p55 = scmp.ne.s32.totalorder %s41, %s42
      %p56 = scmp.eq.s32.totalorder %s22, 5
      %p57 = por %p55, %p56
      %p59 = scmp.ne.s32.totalorder %s42, %s58
      %p60 = scmp.eq.s32.totalorder %s22, 0
      %p61 = por %p59, %p60
      %s62 = ssub.s32 %s23, %s35
      %p63 = scmp.eq.s32.totalorder %s62, 0
      %s65 = sadd.s32 %s64, 1
      %s66 = scalar_select %p63, %s64, %s65
      %p69 = pneg %p63
      %p70 = scmp.eq.s32.totalorder %s16, 5
      %p71 = por %p69, %p70
      %p72 = scmp.ne.s32.totalorder %s64, %s67
      %p73 = scmp.eq.s32.totalorder %s16, 0
      %p74 = por %p72, %p73
      %p75 = scmp.ne.s32.totalorder %s64, %s67
      %p76 = scmp.eq.s32.totalorder %s21, 5
      %p77 = por %p75, %p76
      %p78 = scmp.ne.s32.totalorder %s67, %s68
      %p79 = scmp.eq.s32.totalorder %s21, 0
      %p80 = por %p78, %p79
      %p81 = scmp.ne.s32.totalorder %s67, %s68
      %p82 = scmp.eq.s32.totalorder %s22, 5
      %p83 = por %p81, %p82
      %p85 = scmp.ne.s32.totalorder %s68, %s84
      %p86 = scmp.eq.s32.totalorder %s22, 0
      %p87 = por %p85, %p86
      %s88 = ssub.s32 %s24, %s31
      %p89 = scmp.eq.s32.totalorder %s88, 0
      %s91 = sadd.s32 %s90, 1
      %s92 = scalar_select %p89, %s90, %s91
      %p95 = pneg %p89
      %p96 = scmp.eq.s32.totalorder %s16, 5
      %p97 = por %p95, %p96
      %p98 = scmp.ne.s32.totalorder %s90, %s93
      %p99 = scmp.eq.s32.totalorder %s16, 0
      %p100 = por %p98, %p99
      %p101 = scmp.ne.s32.totalorder %s90, %s93
      %p102 = scmp.eq.s32.totalorder %s21, 5
      %p103 = por %p101, %p102
      %p104 = scmp.ne.s32.totalorder %s93, %s94
      %p105 = scmp.eq.s32.totalorder %s21, 0
      %p106 = por %p104, %p105
      %p107 = scmp.ne.s32.totalorder %s93, %s94
      %p108 = scmp.eq.s32.totalorder %s22, 5
      %p109 = por %p107, %p108
      %p111 = scmp.ne.s32.totalorder %s94, %s110
      %p112 = scmp.eq.s32.totalorder %s22, 0
      %p113 = por %p111, %p112
      %s114 = ssub.s32 %s24, %s31
      %p115 = scmp.eq.s32.totalorder %s114, 0
      %s117 = sadd.s32 %s116, 1
      %s118 = scalar_select %p115, %s116, %s117
      %p121 = pneg %p115
      %p122 = scmp.eq.s32.totalorder %s16, 5
      %p123 = por %p121, %p122
      %p124 = scmp.ne.s32.totalorder %s116, %s119
      %p125 = scmp.eq.s32.totalorder %s16, 0
      %p126 = por %p124, %p125
      %p127 = scmp.ne.s32.totalorder %s116, %s119
      %p128 = scmp.eq.s32.totalorder %s21, 5
      %p129 = por %p127, %p128
      %p130 = scmp.ne.s32.totalorder %s119, %s120
      %p131 = scmp.eq.s32.totalorder %s21, 0
      %p132 = por %p130, %p131
      %p133 = scmp.ne.s32.totalorder %s119, %s120
      %p134 = scmp.eq.s32.totalorder %s22, 5
      %p135 = por %p133, %p134
      %p137 = scmp.ne.s32.totalorder %s120, %s136
      %p138 = scmp.eq.s32.totalorder %s22, 0
      %p139 = por %p137, %p138
      %s140 = ssub.s32 %s23, %s35
      %p141 = scmp.eq.s32.totalorder %s140, 0
      %s143 = sadd.s32 %s142, 1
      %s144 = scalar_select %p141, %s142, %s143
      %p147 = pneg %p141
      %p148 = scmp.eq.s32.totalorder %s16, 5
      %p149 = por %p147, %p148
      %p150 = scmp.ne.s32.totalorder %s142, %s145
      %p151 = scmp.eq.s32.totalorder %s16, 0
      %p152 = por %p150, %p151
      %p153 = scmp.ne.s32.totalorder %s142, %s145
      %p154 = scmp.eq.s32.totalorder %s21, 5
      %p155 = por %p153, %p154
      %p156 = scmp.ne.s32.totalorder %s145, %s146
      %p157 = scmp.eq.s32.totalorder %s21, 0
      %p158 = por %p156, %p157
      %p159 = scmp.ne.s32.totalorder %s145, %s146
      %p160 = scmp.eq.s32.totalorder %s22, 5
      %p161 = por %p159, %p160
      %p163 = scmp.ne.s32.totalorder %s146, %s162
      %p164 = scmp.eq.s32.totalorder %s22, 0
      %p165 = por %p163, %p164
      %p166 = scmp.le.s32.totalorder 1, %s16
      %p167 = scmp.lt.s32.totalorder %s16, 7
      %p168 = pnand %p166, %p167
      %p169 = pneg %p168
      // Predicated region
      $region9: #{tpu_custom_call.1} parent=5 // pred_check
        _
      $region10: #{tpu_custom_call.1} parent=5 // pred_check_branch
        %171 = sbr.rel (%p168) target = $region12
      $region11: #{tpu_custom_call.1} parent=5 // pred_region
        %s172 = ssub.s32 %s16, 1
      $region12: #{tpu_custom_call.1} parent=5 // pred_fallthru
        _
      %p173 = scmp.lt.s32.totalorder %s16, 6
      // Predicated region
      $region13: #{tpu_custom_call.1} parent=5 // pred_check
        %p174 = pneg %p173
      $region14: #{tpu_custom_call.1} parent=5 // pred_check_branch
        %176 = sbr.rel (%p174) target = $region16
      $region15: #{tpu_custom_call.1} parent=5 // pred_region
        // Predicated region
        $region17: #{tpu_custom_call.1} parent=15 // pred_check
          %p177 = pneg %p48
        $region18: #{tpu_custom_call.1} parent=15 // pred_check_branch
          %179 = sbr.rel (%p177) target = $region20
        $region19: #{tpu_custom_call.1} parent=15 // pred_region
          %p180 = scmp.lt.s32.totalorder %s23, 1
          %s181 = scalar_select %p180, %s23, 1
          %s182 = smul.addr %s181, 6
          %s183 = smul.addr %s182, 8
          %s184 = scalar_lea.vmem %s0, %s183
        $region20: #{tpu_custom_call.1} parent=15 // pred_fallthru
          _
        // Predicated region
        $region21: #{tpu_custom_call.1} parent=15 // pred_check
          %p185 = pneg %p74
        $region22: #{tpu_custom_call.1} parent=15 // pred_check_branch
          %187 = sbr.rel (%p185) target = $region24
        $region23: #{tpu_custom_call.1} parent=15 // pred_region
          %p188 = scmp.lt.s32.totalorder %s23, 1
          %s189 = scalar_select %p188, %s23, 1
          %s190 = smul.addr %s189, 6
          %s191 = smul.addr %s190, 8
          %s192 = scalar_lea.vmem %s1, %s191
        $region24: #{tpu_custom_call.1} parent=15 // pred_fallthru
          _
        // Predicated region
        $region25: #{tpu_custom_call.1} parent=15 // pred_check
          %p193 = pneg %p100
        $region26: #{tpu_custom_call.1} parent=15 // pred_check_branch
          %195 = sbr.rel (%p193) target = $region28
        $region27: #{tpu_custom_call.1} parent=15 // pred_region
          %s196 = sand.u32 %s90, 1
          %s197 = scalar_lea.sflag [#allocation4], %s196
          %s198 = sand.u32 %s90, 1
          %s199 = smul.addr %s198, 216
          %s200 = scalar_lea.vmem [#allocation3], %s199
          %s202 = ssub.s32 3456, 3456
          %203 = vsyncadd %s197, %s202
          %s204 = smul.addr %s24, 54
          %s205 = smul.addr %s204, 64
          %s206 = scalar_lea.hbm %s2, %s205
          %s207 = sshll.u32 %s200, 4
          %s208 = int_to_ptr.vmem [resolvable:$true] %s207
          %213 = dma.hbm_to_vmem [thread:$0]  %s206, 3456, %s208, %s197, 64, 64, 4
        $region28: #{tpu_custom_call.1} parent=15 // pred_fallthru
          _
        // Predicated region
        $region29: #{tpu_custom_call.1} parent=15 // pred_check
          %p214 = pneg %p126
        $region30: #{tpu_custom_call.1} parent=15 // pred_check_branch
          %216 = sbr.rel (%p214) target = $region32
        $region31: #{tpu_custom_call.1} parent=15 // pred_region
          %p217 = scmp.lt.s32.totalorder %s24, 2
          %s218 = scalar_select %p217, %s24, 2
          %s219 = scalar_lea.vmem %s3, %s218
        $region32: #{tpu_custom_call.1} parent=15 // pred_fallthru
          _
      $region16: #{tpu_custom_call.1} parent=5 // pred_fallthru
        _
      %p220 = scmp.le.s32.totalorder 1, %s16
      %p221 = scmp.lt.s32.totalorder %s16, 7
      %p222 = pnand %p220, %p221
      %p223 = pneg %p222
      // Predicated region
      $region33: #{tpu_custom_call.1} parent=5 // pred_check
        _
      $region34: #{tpu_custom_call.1} parent=5 // pred_check_branch
        %225 = sbr.rel (%p222) target = $region36
      $region35: #{tpu_custom_call.1} parent=5 // pred_region
        %s226 = ssub.s32 %s16, 1
        %s227 = sand.u32 %s93, 1
        %s228 = scalar_lea.sflag [#allocation4], %s227
        %s229 = sand.u32 %s93, 1
        %s230 = smul.addr %s229, 216
        %s231 = scalar_lea.vmem [#allocation3], %s230
        // Predicated region
        $region37: #{tpu_custom_call.1} parent=35 // pred_check
          %p232 = pneg %p106
        $region38: #{tpu_custom_call.1} parent=35 // pred_check_branch
          %234 = sbr.rel (%p232) target = $region40
        $region39: #{tpu_custom_call.1} parent=35 // pred_region
          %235 = dma.done %s228, 3456
        $region40: #{tpu_custom_call.1} parent=35 // pred_fallthru
          _
        %p236 = scmp.lt.s32.totalorder %s25, 1
        %s237 = scalar_select %p236, %s25, 1
        %s238 = smul.addr %s237, 6
        %s239 = smul.addr %s238, 8
        %s240 = scalar_lea.vmem %s0, %s239
        %p241 = pneg %p54
        %p242 = pneg %p51
        %p243 = scmp.lt.s32.totalorder %s25, 1
        %s244 = scalar_select %p243, %s25, 1
        %s245 = smul.addr %s244, 6
        %s246 = smul.addr %s245, 8
        %s247 = scalar_lea.vmem %s1, %s246
        %p248 = pneg %p80
        %p249 = pneg %p77
        %s250 = sand.u32 %s93, 1
        %s251 = scalar_lea.sflag [#allocation4], %s250
        %s252 = sand.u32 %s93, 1
        %s253 = smul.addr %s252, 216
        %s254 = scalar_lea.vmem [#allocation3], %s253
        %p255 = pneg %p106
        %p256 = pneg %p103
        %p257 = scmp.lt.s32.totalorder %s26, 2
        %s258 = scalar_select %p257, %s26, 2
        %s259 = scalar_lea.vmem %s3, %s258
        %p260 = pneg %p132
        %p261 = pneg %p129
        %p262 = pneg %p158
        %p263 = pneg %p155
        %s264 = sand.u32 %s145, 1
        %s265 = scalar_lea.sflag [#allocation5], %s264
        %s266 = sand.u32 %s145, 1
        %s267 = smul.addr %s266, 16
        %s268 = scalar_lea.vmem [#allocation6], %s267
        %p269 = scmp.lt.s32.totalorder %s25, 1
        %s270 = scalar_select %p269, %s25, 1
        %s271 = smul.addr %s270, 6
        %s272 = smul.addr %s271, 8
        %s273 = scalar_lea.vmem %s0, %s272
        %p274 = scmp.lt.s32.totalorder %s25, 1
        %s275 = scalar_select %p274, %s25, 1
        %s276 = smul.addr %s275, 6
        %s277 = smul.addr %s276, 8
        %s278 = scalar_lea.vmem %s1, %s277
        %p279 = scmp.lt.s32.totalorder %s26, 2
        %s280 = scalar_select %p279, %s26, 2
        %s281 = scalar_lea.vmem %s3, %s280
        %p283 = scmp.eq.s32.totalorder %s26, 0
        // Predicated region
        $region41: #{tpu_custom_call.1} parent=35 // pred_check
          %p284 = pneg %p283
        $region42: #{tpu_custom_call.1} parent=35 // pred_check_branch
          %286 = sbr.rel (%p284) target = $region44
        $region43: #{tpu_custom_call.1} parent=35 // pred_region
          %v287 = vld [vmem:[%s273] sm:$0xff]
          %v288 = vld [vmem:[%s273 + $0x8] sm:$0xff]
          %v289 = vld [vmem:[%s273 + $0x10] sm:$0xff]
          %v290 = vld [vmem:[%s273 + $0x18] sm:$0xff]
          %v291 = vld [vmem:[%s273 + $0x20] sm:$0x3]
          %v292 = vld [vmem:[%s273 + $0x28] sm:$0x3]
          %293 = vst [vmem:[#allocation2] sm:$0xff] %v287
          %vm294 = vcmask 130048
          %295 = vst.msk [vmem:[#allocation2 + $0x8] sm:$0xff] %vm294, %v288
          %296 = vst [vmem:[#allocation2 + $0x10] sm:$0xff] %v289
          %297 = vst.msk [vmem:[#allocation2 + $0x18] sm:$0xff] %vm294, %v290
          %298 = vst [vmem:[#allocation2 + $0x20] sm:$0x3] %v291
          %vm299 = vcmask 123904
          %300 = vst.msk [vmem:[#allocation2 + $0x28] sm:$0x3] %vm299, %v292
        $region44: #{tpu_custom_call.1} parent=35 // pred_fallthru
          _
        %p301 = scmp.gt.s32.totalorder %s26, 0
        %s302 = scalar_select %p301, 1, 0
        %s303 = scvt.s32.f32 %s302
        %v304 = vld [vmem:[#allocation2] sm:$0xff]
        %v305 = vld [vmem:[#allocation2 + $0x8] sm:$0xff]
        %v306 = vld [vmem:[#allocation2 + $0x10] sm:$0xff]
        %v307 = vld [vmem:[#allocation2 + $0x18] sm:$0xff]
        %v308 = vld [vmem:[#allocation2 + $0x20] sm:$0x3]
        %v309 = vld [vmem:[#allocation2 + $0x28] sm:$0x3]
        %v310 = vld [vmem:[%s278] sm:$0xff]
        %v311 = vld [vmem:[%s278 + $0x8] sm:$0xff]
        %v312 = vld [vmem:[%s278 + $0x10] sm:$0xff]
        %v313 = vld [vmem:[%s278 + $0x18] sm:$0xff]
        %v314 = vld [vmem:[%s278 + $0x20] sm:$0x3]
        %v315 = vld [vmem:[%s278 + $0x28] sm:$0x3]
        %v316 = vstv %s303
        %v317 = vmul.f32 %v316, %v310
        %v318 = vmul.f32 %v316, %v311
        %v319 = vmul.f32 %v316, %v312
        %v320 = vmul.f32 %v316, %v313
        %v321 = vmul.f32 %v316, %v314
        %v322 = vmul.f32 %v316, %v315
        %v323 = vadd.f32 %v304, %v317
        %v324 = vadd.f32 %v305, %v318
        %v325 = vadd.f32 %v306, %v319
        %v326 = vadd.f32 %v307, %v320
        %v327 = vadd.f32 %v308, %v321
        %v328 = vadd.f32 %v309, %v322
        %v329 = vpack.c.bf16 %v325, %v323
        %v330 = vpack.c.bf16 %v326, %v324
        %v331 = vld [vmem:[%s231] sm:$0xf]
        %v332 = vld [vmem:[%s231 + $0x4] sm:$0xf]
        %v333 = vld [vmem:[%s231 + $0x8] sm:$0xf]
        %v334 = vld [vmem:[%s231 + $0xc] sm:$0xf]
        %v335 = vld [vmem:[%s231 + $0x10] sm:$0xf]
        %v336 = vld [vmem:[%s231 + $0x14] sm:$0xf]
        %v337 = vld [vmem:[%s231 + $0x18] sm:$0xf]
        %v338 = vld [vmem:[%s231 + $0x1c] sm:$0xf]
        %v339 = vld [vmem:[%s231 + $0x20] sm:$0xf]
        %v340 = vld [vmem:[%s231 + $0x24] sm:$0xf]
        %v341 = vld [vmem:[%s231 + $0x28] sm:$0xf]
        %v342 = vld [vmem:[%s231 + $0x2c] sm:$0xf]
        %v343 = vld [vmem:[%s231 + $0x30] sm:$0xf]
        %v344 = vld [vmem:[%s231 + $0x34] sm:$0xf]
        %v345 = vld [vmem:[%s231 + $0x38] sm:$0xf]
        %v346 = vld [vmem:[%s231 + $0x3c] sm:$0xf]
        %v347 = vld [vmem:[%s231 + $0x40] sm:$0xf]
        %v348 = vld [vmem:[%s231 + $0x44] sm:$0xf]
        %v349 = vpack.c.bf16 %v327, %v327
        %v350 = vpack.c.bf16 %v328, %v328
        %s351 = scalar_lea.vmem %s231, 72 [#allocation3]
        %v352 = vld [vmem:[%s351] sm:$0xf]
        %v353 = vld [vmem:[%s351 + $0x4] sm:$0xf]
        %v354 = vld [vmem:[%s351 + $0x8] sm:$0xf]
        %v355 = vld [vmem:[%s351 + $0xc] sm:$0xf]
        %v356 = vld [vmem:[%s351 + $0x10] sm:$0xf]
        %v357 = vld [vmem:[%s351 + $0x14] sm:$0xf]
        %v358 = vld [vmem:[%s351 + $0x18] sm:$0xf]
        %v359 = vld [vmem:[%s351 + $0x1c] sm:$0xf]
        %v360 = vld [vmem:[%s351 + $0x20] sm:$0xf]
        %v361 = vld [vmem:[%s351 + $0x24] sm:$0xf]
        %v362 = vld [vmem:[%s351 + $0x28] sm:$0xf]
        %v363 = vld [vmem:[%s351 + $0x2c] sm:$0xf]
        %v364 = vld [vmem:[%s351 + $0x30] sm:$0xf]
        %v365 = vld [vmem:[%s351 + $0x34] sm:$0xf]
        %v366 = vld [vmem:[%s351 + $0x38] sm:$0xf]
        %v367 = vld [vmem:[%s351 + $0x3c] sm:$0xf]
        %v368 = vld [vmem:[%s351 + $0x40] sm:$0xf]
        %v369 = vld [vmem:[%s351 + $0x44] sm:$0xf]
        %vm370 = vsmask.f32 7424
        %v372 = vshrl.u32 %v329, 16
        %v374 = vshll.u32 %v329, 16
        %v376 = vrot.slane %v374, 1
        %v377 = vor.u32 %v372, %v376
        %v379 = vshll.u32 %v349, 16
        %v381 = vrot.slane %v379, 1
        %v382 = vsel %vm370, %v377, %v381
        %v384 = vshrl.u32 %v330, 16
        %v386 = vshll.u32 %v330, 16
        %v388 = vrot.slane %v386, 1
        %v389 = vor.u32 %v384, %v388
        %v391 = vshll.u32 %v350, 16
        %v393 = vrot.slane %v391, 1
        %v394 = vsel %vm370, %v389, %v393
        %v414 = vunpack.c.l.b16 %v352
        %v415 = vunpack.c.l.b16 %v353
        %v416 = vunpack.c.l.b16 %v354
        %v417 = vunpack.c.l.b16 %v355
        %v418 = vunpack.c.l.b16 %v356
        %v419 = vunpack.c.l.b16 %v357
        %v420 = vunpack.c.l.b16 %v358
        %v421 = vunpack.c.l.b16 %v359
        %v422 = vunpack.c.l.b16 %v360
        %v423 = vunpack.c.l.b16 %v361
        %v424 = vunpack.c.l.b16 %v362
        %v425 = vunpack.c.l.b16 %v363
        %v426 = vunpack.c.l.b16 %v364
        %v427 = vunpack.c.l.b16 %v365
        %v428 = vunpack.c.l.b16 %v366
        %v429 = vunpack.c.l.b16 %v367
        %v430 = vunpack.c.l.b16 %v368
        %v431 = vunpack.c.l.b16 %v369
        %v432 = vpack.c.b16 %v415, %v414
        %v433 = vpack.c.b16 %v417, %v416
        %v434 = vpack.c.b16 %v419, %v418
        %v435 = vpack.c.b16 %v421, %v420
        %v436 = vpack.c.b16 %v423, %v422
        %v437 = vpack.c.b16 %v425, %v424
        %v438 = vpack.c.b16 %v427, %v426
        %v439 = vpack.c.b16 %v429, %v428
        %v440 = vpack.c.b16 %v431, %v430
        %vm450 = vcmask 130048
        %v452 = vsel %vm450, %v394, 0
        %454 = vmatprep.subr.bf16.mxu0 0
        %455 = vmatpush1.bf16.msra.mxu0 %v432
        %456 = vmatprep.subr.bf16.mxu0 0
        %457 = vmatpush1.bf16.msra.mxu0 %v433
        %458 = vmatprep.subr.bf16.mxu0 0
        %459 = vmatpush1.bf16.msra.mxu0 %v434
        %460 = vmatprep.subr.bf16.mxu0 0
        %461 = vmatpush1.bf16.msra.mxu0 %v435
        %462 = vmatprep.subr.bf16.mxu0 0
        %463 = vmatpush1.bf16.msra.mxu0 %v436
        %464 = vmatprep.subr.bf16.mxu0 0
        %465 = vmatpush1.bf16.msra.mxu0 %v437
        %466 = vmatprep.subr.bf16.mxu0 0
        %467 = vmatpush1.bf16.msra.mxu0 %v438
        %468 = vmatprep.subr.bf16.mxu0 0
        %469 = vmatpush1.bf16.msra.mxu0 %v439
        %470 = vmatprep.subr.bf16.mxu0 0
        %471 = vmatpush1.bf16.msra.mxu0 %v440
        %472 = vmatprep.subr.bf16.mxu0 0
        %473 = vmatpush1.bf16.msra.mxu0 0
        %474 = vmatprep.subr.bf16.mxu0 0
        %475 = vmatpush1.bf16.msra.mxu0 0
        %476 = vmatprep.subr.bf16.mxu0 0
        %477 = vmatpush1.bf16.msra.mxu0 0
        %478 = vmatprep.subr.bf16.mxu0 0
        %479 = vmatpush1.bf16.msra.mxu0 0
        %480 = vmatprep.subr.bf16.mxu0 0
        %481 = vmatpush1.bf16.msra.mxu0 0
        %482 = vmatprep.subr.bf16.mxu0 0
        %483 = vmatpush1.bf16.msra.mxu0 0
        %484 = vmatprep.subr.bf16.mxu0 0
        %485 = vmatpush1.bf16.msra.mxu0 0
        %486 = vmatprep.mubr.bf16.mxu0 %v452
        %487 = vmatmul.mubr.bf16.gmra.mrb[0].mxu0 %v382
        %v488 = vpop.f32.mrb[0].mxu0
        %v489 = vadd.f32 0.0, %v488
        %v490 = vpop.f32.mrb[0].mxu0
        %v491 = vpop.f32.mrb[0].mxu0
        %v492 = vadd.f32 0.0, %v491
        %v493 = vpop.f32.mrb[0].mxu0
        %494 = vdwg.mxu0
        %v513 = vunpack.c.l.b16 %v331
        %v514 = vunpack.c.l.b16 %v332
        %v515 = vunpack.c.l.b16 %v333
        %v516 = vunpack.c.l.b16 %v334
        %v517 = vunpack.c.l.b16 %v335
        %v518 = vunpack.c.l.b16 %v336
        %v519 = vunpack.c.l.b16 %v337
        %v520 = vunpack.c.l.b16 %v338
        %v521 = vunpack.c.l.b16 %v339
        %v522 = vunpack.c.l.b16 %v340
        %v523 = vunpack.c.l.b16 %v341
        %v524 = vunpack.c.l.b16 %v342
        %v525 = vunpack.c.l.b16 %v343
        %v526 = vunpack.c.l.b16 %v344
        %v527 = vunpack.c.l.b16 %v345
        %v528 = vunpack.c.l.b16 %v346
        %v529 = vunpack.c.l.b16 %v347
        %v530 = vunpack.c.l.b16 %v348
        %v531 = vpack.c.b16 %v514, %v513
        %v532 = vpack.c.b16 %v516, %v515
        %v533 = vpack.c.b16 %v518, %v517
        %v534 = vpack.c.b16 %v520, %v519
        %v535 = vpack.c.b16 %v522, %v521
        %v536 = vpack.c.b16 %v524, %v523
        %v537 = vpack.c.b16 %v526, %v525
        %v538 = vpack.c.b16 %v528, %v527
        %v539 = vpack.c.b16 %v530, %v529
        %v549 = vsel %vm450, %v330, 0
        %551 = vmatprep.subr.bf16.mxu0 0
        %552 = vmatpush1.bf16.msra.mxu0 %v531
        %553 = vmatprep.subr.bf16.mxu0 0
        %554 = vmatpush1.bf16.msra.mxu0 %v532
        %555 = vmatprep.subr.bf16.mxu0 0
        %556 = vmatpush1.bf16.msra.mxu0 %v533
        %557 = vmatprep.subr.bf16.mxu0 0
        %558 = vmatpush1.bf16.msra.mxu0 %v534
        %559 = vmatprep.subr.bf16.mxu0 0
        %560 = vmatpush1.bf16.msra.mxu0 %v535
        %561 = vmatprep.subr.bf16.mxu0 0
        %562 = vmatpush1.bf16.msra.mxu0 %v536
        %563 = vmatprep.subr.bf16.mxu0 0
        %564 = vmatpush1.bf16.msra.mxu0 %v537
        %565 = vmatprep.subr.bf16.mxu0 0
        %566 = vmatpush1.bf16.msra.mxu0 %v538
        %567 = vmatprep.subr.bf16.mxu0 0
        %568 = vmatpush1.bf16.msra.mxu0 %v539
        %569 = vmatprep.subr.bf16.mxu0 0
        %570 = vmatpush1.bf16.msra.mxu0 0
        %571 = vmatprep.subr.bf16.mxu0 0
        %572 = vmatpush1.bf16.msra.mxu0 0
        %573 = vmatprep.subr.bf16.mxu0 0
        %574 = vmatpush1.bf16.msra.mxu0 0
        %575 = vmatprep.subr.bf16.mxu0 0
        %576 = vmatpush1.bf16.msra.mxu0 0
        %577 = vmatprep.subr.bf16.mxu0 0
        %578 = vmatpush1.bf16.msra.mxu0 0
        %579 = vmatprep.subr.bf16.mxu0 0
        %580 = vmatpush1.bf16.msra.mxu0 0
        %581 = vmatprep.subr.bf16.mxu0 0
        %582 = vmatpush1.bf16.msra.mxu0 0
        %583 = vmatprep.mubr.bf16.mxu0 %v549
        %584 = vmatmul.mubr.bf16.gmra.mrb[0].mxu0 %v329
        %v585 = vpop.f32.mrb[0].mxu0
        %v586 = vadd.f32 %v489, %v585
        %v587 = vpop.f32.mrb[0].mxu0
        %v588 = vpop.f32.mrb[0].mxu0
        %v589 = vadd.f32 %v492, %v588
        %v590 = vpop.f32.mrb[0].mxu0
        %591 = vdwg.mxu0
        %s592 = scalar_lea.vmem %s231, 144 [#allocation3]
        %v593 = vld [vmem:[%s592] sm:$0xf]
        %v594 = vld [vmem:[%s592 + $0x4] sm:$0xf]
        %v595 = vld [vmem:[%s592 + $0x8] sm:$0xf]
        %v596 = vld [vmem:[%s592 + $0xc] sm:$0xf]
        %v597 = vld [vmem:[%s592 + $0x10] sm:$0xf]
        %v598 = vld [vmem:[%s592 + $0x14] sm:$0xf]
        %v599 = vld [vmem:[%s592 + $0x18] sm:$0xf]
        %v600 = vld [vmem:[%s592 + $0x1c] sm:$0xf]
        %v601 = vld [vmem:[%s592 + $0x20] sm:$0xf]
        %v602 = vld [vmem:[%s592 + $0x24] sm:$0xf]
        %v603 = vld [vmem:[%s592 + $0x28] sm:$0xf]
        %v604 = vld [vmem:[%s592 + $0x2c] sm:$0xf]
        %v605 = vld [vmem:[%s592 + $0x30] sm:$0xf]
        %v606 = vld [vmem:[%s592 + $0x34] sm:$0xf]
        %v607 = vld [vmem:[%s592 + $0x38] sm:$0xf]
        %v608 = vld [vmem:[%s592 + $0x3c] sm:$0xf]
        %v609 = vld [vmem:[%s592 + $0x40] sm:$0xf]
        %v610 = vld [vmem:[%s592 + $0x44] sm:$0xf]
        %vm615 = vcmask 1046528
        %v616 = vrot.slane %v329, 1
        %v617 = vrot.slane %v349, 1
        %v618 = vsel %vm615, %v616, %v617
        %v619 = vrot.slane %v330, 1
        %v620 = vrot.slane %v350, 1
        %v621 = vsel %vm615, %v619, %v620
        %v641 = vunpack.c.l.b16 %v593
        %v642 = vunpack.c.l.b16 %v594
        %v643 = vunpack.c.l.b16 %v595
        %v644 = vunpack.c.l.b16 %v596
        %v645 = vunpack.c.l.b16 %v597
        %v646 = vunpack.c.l.b16 %v598
        %v647 = vunpack.c.l.b16 %v599
        %v648 = vunpack.c.l.b16 %v600
        %v649 = vunpack.c.l.b16 %v601
        %v650 = vunpack.c.l.b16 %v602
        %v651 = vunpack.c.l.b16 %v603
        %v652 = vunpack.c.l.b16 %v604
        %v653 = vunpack.c.l.b16 %v605
        %v654 = vunpack.c.l.b16 %v606
        %v655 = vunpack.c.l.b16 %v607
        %v656 = vunpack.c.l.b16 %v608
        %v657 = vunpack.c.l.b16 %v609
        %v658 = vunpack.c.l.b16 %v610
        %v659 = vpack.c.b16 %v642, %v641
        %v660 = vpack.c.b16 %v644, %v643
        %v661 = vpack.c.b16 %v646, %v645
        %v662 = vpack.c.b16 %v648, %v647
        %v663 = vpack.c.b16 %v650, %v649
        %v664 = vpack.c.b16 %v652, %v651
        %v665 = vpack.c.b16 %v654, %v653
        %v666 = vpack.c.b16 %v656, %v655
        %v667 = vpack.c.b16 %v658, %v657
        %v678 = vsel %vm450, %v621, 0
        %680 = vmatprep.subr.bf16.mxu0 0
        %681 = vmatpush1.bf16.msra.mxu0 %v659
        %682 = vmatprep.subr.bf16.mxu0 0
        %683 = vmatpush1.bf16.msra.mxu0 %v660
        %684 = vmatprep.subr.bf16.mxu0 0
        %685 = vmatpush1.bf16.msra.mxu0 %v661
        %686 = vmatprep.subr.bf16.mxu0 0
        %687 = vmatpush1.bf16.msra.mxu0 %v662
        %688 = vmatprep.subr.bf16.mxu0 0
        %689 = vmatpush1.bf16.msra.mxu0 %v663
        %690 = vmatprep.subr.bf16.mxu0 0
        %691 = vmatpush1.bf16.msra.mxu0 %v664
        %692 = vmatprep.subr.bf16.mxu0 0
        %693 = vmatpush1.bf16.msra.mxu0 %v665
        %694 = vmatprep.subr.bf16.mxu0 0
        %695 = vmatpush1.bf16.msra.mxu0 %v666
        %696 = vmatprep.subr.bf16.mxu0 0
        %697 = vmatpush1.bf16.msra.mxu0 %v667
        %698 = vmatprep.subr.bf16.mxu0 0
        %699 = vmatpush1.bf16.msra.mxu0 0
        %700 = vmatprep.subr.bf16.mxu0 0
        %701 = vmatpush1.bf16.msra.mxu0 0
        %702 = vmatprep.subr.bf16.mxu0 0
        %703 = vmatpush1.bf16.msra.mxu0 0
        %704 = vmatprep.subr.bf16.mxu0 0
        %705 = vmatpush1.bf16.msra.mxu0 0
        %706 = vmatprep.subr.bf16.mxu0 0
        %707 = vmatpush1.bf16.msra.mxu0 0
        %708 = vmatprep.subr.bf16.mxu0 0
        %709 = vmatpush1.bf16.msra.mxu0 0
        %710 = vmatprep.subr.bf16.mxu0 0
        %711 = vmatpush1.bf16.msra.mxu0 0
        %712 = vmatprep.mubr.bf16.mxu0 %v678
        %713 = vmatmul.mubr.bf16.gmra.mrb[0].mxu0 %v618
        %v714 = vpop.f32.mrb[0].mxu0
        %v715 = vadd.f32 0.0, %v714
        %v716 = vpop.f32.mrb[0].mxu0
        %v717 = vpop.f32.mrb[0].mxu0
        %v718 = vadd.f32 0.0, %v717
        %v719 = vpop.f32.mrb[0].mxu0
        %720 = vdwg.mxu0
        %v721 = vadd.f32 %v586, %v715
        %v722 = vadd.f32 %v589, %v718
        %v723 = vld [vmem:[%s281] sm:$0x1]
        %v725 = vlaneseq
        %v726 = vshrl.u32 %v725, 7
        %v727 = vsub.s32 0, %v726
        %v728 = vrot.slane %v723, %v727
        %v730 = vadd.f32 %v721, %v728
        %v731 = vadd.f32 %v722, %v728
        %v732 = vmax.f32 %v730, 0.0
        %v733 = vmax.f32 %v731, 0.0
        %p734 = scmp.lt.s32.totalorder %s26, 2
        // Predicated region
        $region45: #{tpu_custom_call.1} parent=35 // pred_check
          %p735 = pneg %p734
        $region46: #{tpu_custom_call.1} parent=35 // pred_check_branch
          %737 = sbr.rel (%p735) target = $region48
        $region47: #{tpu_custom_call.1} parent=35 // pred_region
          %vm740 = vcmask 1040384
          %v741 = vrot.slane %v732, 7
          %v742 = vrot.slane %v733, 7
          %v743 = vsel %vm740, %v741, %v742
          %744 = vrot.lane.b32.xlu0 %v741, 8
          %v745 = vpop.permute.xlu0 %744
          %746 = vrot.lane.b32.xlu0 %v743, 8
          %v747 = vpop.permute.xlu0 %746
          %748 = vrot.lane.b32.xlu0 %v742, 8
          %v749 = vpop.permute.xlu0 %748
          %vm753 = vcmask 1047617
          %754 = vst.msk [vmem:[#allocation2] sm:$0xfe] %vm753, %v745
          %vm755 = vcmask 64513
          %756 = vst.msk [vmem:[#allocation2 + $0x8] sm:$0xfe] %vm755, %v745
          %vm757 = vcmask 1047616
          %758 = vst.msk [vmem:[#allocation2 + $0x10] sm:$0xff] %vm757, %v747
          %vm759 = vcmask 64512
          %760 = vst.msk [vmem:[#allocation2 + $0x18] sm:$0xff] %vm759, %v747
          %vm761 = vcmask 1040448
          %762 = vst.msk [vmem:[#allocation2 + $0x20] sm:$0x1] %vm761, %v749
          %vm763 = vcmask 57344
          %764 = vst.msk [vmem:[#allocation2 + $0x28] sm:$0x1] %vm763, %v749
        $region48: #{tpu_custom_call.1} parent=35 // pred_fallthru
          _
        %p765 = scmp.eq.s32.totalorder %s26, 2
        // Predicated region
        $region49: #{tpu_custom_call.1} parent=35 // pred_check
          %p766 = pneg %p765
        $region50: #{tpu_custom_call.1} parent=35 // pred_check_branch
          %768 = sbr.rel (%p766) target = $region52
        $region51: #{tpu_custom_call.1} parent=35 // pred_region
          %769 = vst [vmem:[%s268] sm:$0xff] %v732
          %770 = vst [vmem:[%s268 + $0x8] sm:$0xff] %v733
        $region52: #{tpu_custom_call.1} parent=35 // pred_fallthru
          _
        %s771 = sand.u32 %s145, 1
        %s772 = scalar_lea.sflag [#allocation5], %s771
        %s773 = sand.u32 %s145, 1
        %s774 = smul.addr %s773, 16
        %s775 = scalar_lea.vmem [#allocation6], %s774
        // Predicated region
        $region53: #{tpu_custom_call.1} parent=35 // pred_check
          %p776 = pneg %p155
        $region54: #{tpu_custom_call.1} parent=35 // pred_check_branch
          %778 = sbr.rel (%p776) target = $region56
        $region55: #{tpu_custom_call.1} parent=35 // pred_region
          %s780 = ssub.s32 256, 256
          %781 = vsyncadd %s772, %s780
          %s782 = smul.addr %s25, 2
          %s783 = smul.addr %s782, 128
          %s784 = scalar_lea.hbm %s4, %s783
          %s785 = sshll.u32 %s775, 4
          %s786 = int_to_ptr.vmem [resolvable:$true] %s785
          %791 = dma.vmem_to_hbm [thread:$0]  %s786, 256, %s784, %s772, 128, 128, 8
        $region56: #{tpu_custom_call.1} parent=35 // pred_fallthru
          _
      $region36: #{tpu_custom_call.1} parent=5 // pred_fallthru
        _
      %p792 = scmp.le.s32.totalorder 2, %s16
      // Predicated region
      $region57: #{tpu_custom_call.1} parent=5 // pred_check
        %p793 = pneg %p792
      $region58: #{tpu_custom_call.1} parent=5 // pred_check_branch
        %795 = sbr.rel (%p793) target = $region60
      $region59: #{tpu_custom_call.1} parent=5 // pred_region
        %s796 = ssub.s32 %s16, 2
        // Predicated region
        $region61: #{tpu_custom_call.1} parent=59 // pred_check
          %p797 = pneg %p161
        $region62: #{tpu_custom_call.1} parent=59 // pred_check_branch
          %799 = sbr.rel (%p797) target = $region64
        $region63: #{tpu_custom_call.1} parent=59 // pred_region
          %s800 = sand.u32 %s146, 1
          %s801 = scalar_lea.sflag [#allocation5], %s800
          %s802 = sand.u32 %s146, 1
          %s803 = smul.addr %s802, 16
          %s804 = scalar_lea.vmem [#allocation6], %s803
          %805 = dma.done %s801, 256
        $region64: #{tpu_custom_call.1} parent=59 // pred_fallthru
          _
      $region60: #{tpu_custom_call.1} parent=5 // pred_fallthru
        _
    $region6: #{tpu_custom_call.1} parent=1 // loop_footer
      %s20 = sadd.s32 1, %s16
    $region7: #{tpu_custom_call.1} parent=1 // loop_footer_branch
      %15 = sbr.rel target = $region3
    $region8: #{tpu_custom_call.1} parent=1 // loop_exit
      _
    %806 = vsyncpa [#allocation4], 1
    %s807 = scalar_lea.sflag [#allocation4], 1
    %808 = vsyncpa %s807, 1
    %809 = vsyncpa [#allocation5], 1
    %s810 = scalar_lea.sflag [#allocation5], 1
    %811 = vsyncpa %s810, 1

</llo_original>
